<compile_context>
chip_gen: v7x
topology: tpu7x:2x2x1
jax: 0.10.0
libtpu: 0.0.40
codegen_flags: <defaults>
</compile_context>

<pallas_src>
import jax
import jax.numpy as jnp
from jax.experimental import pallas as pl
from jax.experimental.pallas import tpu as pltpu


def _round_up(x, m):
    return (x + m - 1) // m * m


def _cdiv(a, b):
    return (a + b - 1) // b


# --------------------------------------------------------------------------- #
# Kernel
# --------------------------------------------------------------------------- #
def _fcnn_kernel(x_ref, w1_ref, b1_ref, w2_ref, b2_ref, w3_ref, b3_ref, o_ref):
    f32 = jnp.float32
    x = x_ref[...].astype(f32)
    # fc1 + ReLU : f32 activations, bf16-stored weights, f32 accumulation
    h = jnp.dot(x, w1_ref[...].astype(f32), preferred_element_type=f32)
    h = jnp.maximum(h + b1_ref[...], 0.0)
    # fc2 + ReLU
    h = jnp.dot(h, w2_ref[...].astype(f32), preferred_element_type=f32)
    h = jnp.maximum(h + b2_ref[...], 0.0)
    # out : raw logits / regression values (no activation), matches FCNN.forward
    # for both 'classification' and 'regression' modes.
    h = jnp.dot(h, w3_ref[...].astype(f32), preferred_element_type=f32)
    o_ref[...] = (h + b3_ref[...]).astype(o_ref.dtype)


# --------------------------------------------------------------------------- #
# One-time parameter preparation (pad hidden dim, cast weights to bf16)
# --------------------------------------------------------------------------- #
def prepare_params(params, *, lane=128):
    """Pad + bf16-cast the FCNN parameters ONCE. Reuse the result across calls.

    `params` holds w1,b1,w2,b2,w3,b3 with weights stored [in_features, out_features]
    (transposed vs. nn.Linear) and biases [out_features].  Only the hidden dim is
    padded (to `lane`); zero padding + zero bias is exact through matmul/ReLU.
    Use lane=256 on v6e/v7x if the model ever becomes MXU-bound.
    """
    w1, b1 = params["w1"], params["b1"]
    w2, b2 = params["w2"], params["b2"]
    w3, b3 = params["w3"], params["b3"]
    in_size, hid = w1.shape
    out_size = w3.shape[1]
    hid_p = _round_up(hid, lane)

    bf16, f32 = jnp.bfloat16, jnp.float32
    w1_p = jnp.zeros((in_size, hid_p), bf16).at[:, :hid].set(w1.astype(bf16))
    w2_p = jnp.zeros((hid_p, hid_p), bf16).at[:hid, :hid].set(w2.astype(bf16))
    w3_p = jnp.zeros((hid_p, out_size), bf16).at[:hid, :].set(w3.astype(bf16))
    b1_p = jnp.zeros((1, hid_p), f32).at[0, :hid].set(b1.astype(f32).reshape(-1))
    b2_p = jnp.zeros((1, hid_p), f32).at[0, :hid].set(b2.astype(f32).reshape(-1))
    b3_p = b3.astype(f32).reshape(1, out_size)

    return {
        "w1": w1_p, "b1": b1_p, "w2": w2_p, "b2": b2_p, "w3": w3_p, "b3": b3_p,
        "in_size": in_size, "hid": hid, "hid_p": hid_p, "out_size": out_size,
    }


# --------------------------------------------------------------------------- #
# Forward wrapper
# --------------------------------------------------------------------------- #
_SINGLE_BUFFER_WEIGHTS_OK = None  # decided lazily at the first call


def fcnn_forward(x, prepared, *, block_b=1024, out_dtype=jnp.float32):
    """Fused FCNN forward.  `prepared` comes from prepare_params().

    Set out_dtype=jnp.bfloat16 to halve output write-back if downstream allows it.
    """
    in_size = prepared["in_size"]
    hid = prepared["hid"]
    hid_p = prepared["hid_p"]
    out_size = prepared["out_size"]

    assert x.shape[-1] == in_size
    lead = x.shape[:-1]
    x2 = x.reshape(-1, in_size)
    B = x2.shape[0]

    w1, b1 = prepared["w1"], prepared["b1"]
    w2, b2 = prepared["w2"], prepared["b2"]
    w3, b3 = prepared["w3"], prepared["b3"]

    # Batch tile: multiple of 8 (sublane), capped at block_b, and chosen so that
    # there are >= 2 grid steps whenever B allows it (lets the "parallel" batch
    # axis actually be split across both v7x TensorCores).  The last tile may be
    # ragged: OOB input rows are garbage that stays row-local, OOB output rows
    # are dropped by the write-back DMA.
    tb = max(8, min(block_b, _round_up(_cdiv(B, 2), 8)))
    grid_b = _cdiv(B, tb)

    x_bytes = jnp.dtype(x2.dtype).itemsize
    o_bytes = jnp.dtype(out_dtype).itemsize
    w_bytes = (w1.size + w2.size + w3.size) * 2 + (b1.size + b2.size + b3.size) * 4
    budget = (2 * tb * in_size * x_bytes        # double-buffered x tiles
              + 2 * tb * out_size * o_bytes     # double-buffered out tiles
              + 2 * w_bytes                     # weights/biases (worst case 2 bufs)
              + 2 * tb * hid_p * 4)             # f32 hidden activations
    vmem_limit = int(min(64 << 20, max(16 << 20, 2 * budget)))

    flops = 2 * B * (in_size * hid + hid * hid + hid * out_size)
    bytes_accessed = x2.size * x_bytes + w_bytes + B * out_size * o_bytes
    cost = pl.CostEstimate(flops=flops, transcendentals=0,
                           bytes_accessed=bytes_accessed)

    def build(single_buffer_weights):
        if single_buffer_weights:
            def resident(shape):
                # Constant block index + single buffer: DMA'd once, VMEM-resident,
                # half the footprint of the default double-buffered path.
                return pl.BlockSpec(shape, lambda i: (0, 0),
                                    pipeline_mode=pl.Buffered(1))
        else:
            def resident(shape):
                # Constant block index: still DMA'd once, but 2 buffers allocated.
                return pl.BlockSpec(shape, lambda i: (0, 0))
        return pl.pallas_call(
            _fcnn_kernel,
            out_shape=jax.ShapeDtypeStruct((B, out_size), out_dtype),
            grid=(grid_b,),
            in_specs=[
                pl.BlockSpec((tb, in_size), lambda i: (i, 0)),  # batch-walked x
                resident(w1.shape), resident(b1.shape),
                resident(w2.shape), resident(b2.shape),
                resident(w3.shape), resident(b3.shape),
            ],
            out_specs=pl.BlockSpec((tb, out_size), lambda i: (i, 0)),
            compiler_params=pltpu.CompilerParams(
                dimension_semantics=("parallel",),   # megacore-shard the batch axis
                vmem_limit_bytes=vmem_limit,
            ),
            cost_estimate=cost,
        )

    args = (x2, w1, b1, w2, b2, w3, b3)

    global _SINGLE_BUFFER_WEIGHTS_OK
    if _SINGLE_BUFFER_WEIGHTS_OK is None:
        try:
            out = jax.block_until_ready(build(True)(*args))
            _SINGLE_BUFFER_WEIGHTS_OK = True
            return out.reshape(*lead, out_size)
        except Exception:
            # Backend rejected single-buffered resident blocks; use the default.
            _SINGLE_BUFFER_WEIGHTS_OK = False
    out = build(_SINGLE_BUFFER_WEIGHTS_OK)(*args)
    return out.reshape(*lead, out_size)


# --------------------------------------------------------------------------- #
# Init + references
# --------------------------------------------------------------------------- #
def init_params(key, input_size, hidden_size, output_size):
    """Deterministic init mimicking nn.Linear's uniform(-1/sqrt(in), 1/sqrt(in))."""
    ks = jax.random.split(key, 6)

    def linear(kw, kb, fan_in, fan_out):
        bound = 1.0 / jnp.sqrt(fan_in)
        w = jax.random.uniform(kw, (fan_in, fan_out), jnp.float32, -bound, bound)
        b = jax.random.uniform(kb, (fan_out,), jnp.float32, -bound, bound)
        return w, b

    w1, b1 = linear(ks[0], ks[1], input_size, hidden_size)
    w2, b2 = linear(ks[2], ks[3], hidden_size, hidden_size)
    w3, b3 = linear(ks[4], ks[5], hidden_size, output_size)
    return {"w1": w1, "b1": b1, "w2": w2, "b2": b2, "w3": w3, "b3": b3}


def _ref_forward_f32(x, params):
    dot = lambda a, b: jnp.dot(a, b, precision=jax.lax.Precision.HIGHEST)
    h = jnp.maximum(dot(x, params["w1"]) + params["b1"], 0.0)
    h = jnp.maximum(dot(h, params["w2"]) + params["b2"], 0.0)
    return dot(h, params["w3"]) + params["b3"]


def _ref_forward_kernel_recipe(x, params):
    """Same numerics as the kernel: bf16-rounded weights, f32 activations/accum."""
    f32 = jnp.float32
    rd = lambda w: w.astype(jnp.bfloat16).astype(f32)
    dot = lambda a, b: jnp.dot(a, b, precision=jax.lax.Precision.HIGHEST)
    h = jnp.maximum(dot(x, rd(params["w1"])) + params["b1"], 0.0)
    h = jnp.maximum(dot(h, rd(params["w2"])) + params["b2"], 0.0)
    return dot(h, rd(params["w3"])) + params["b3"]


# --------------------------------------------------------------------------- #
# Self-test
# --------------------------------------------------------------------------- #
if __name__ == "__main__":
    # mode='classification' or 'regression' only changes the training loss, not
    # forward(); the kernel implements forward() for both.
    batch, input_size, hidden_size, output_size = 8, 16, 32, 4

    key = jax.random.PRNGKey(0)
    kx, kp = jax.random.split(key)
    x = jax.random.normal(kx, (batch, input_size), jnp.float32)
    params = init_params(kp, input_size, hidden_size, output_size)
    prepared = prepare_params(params)   # one-time pad + bf16 cast, reused below

    # Small-shape correctness run (single grid step).
    out = jax.block_until_ready(fcnn_forward(x, prepared))
    assert out.shape == (batch, output_size)
    assert jnp.allclose(out, _ref_forward_kernel_recipe(x, params), atol=1e-2, rtol=1e-2)
    assert jnp.allclose(out, _ref_forward_f32(x, params), atol=5e-2, rtol=5e-2)

    # Larger, tile-misaligned batch: exercises the pipelined batch grid
    # (3 tiles of 1024 with a ragged last tile) and the >=2-tile megacore split.
    big_b = 2088
    xb = jax.random.normal(jax.random.PRNGKey(1), (big_b, input_size), jnp.float32)
    out_big = jax.block_until_ready(fcnn_forward(xb, prepared))
    assert out_big.shape == (big_b, output_size)
    assert jnp.allclose(out_big, _ref_forward_kernel_recipe(xb, params),
                        atol=1e-2, rtol=1e-2)

    print("KERNEL_OK")
</pallas_src>

<mosaic_0001>
module attributes {stable_mosaic.version = 11 : i64} {
  func.func @_fcnn_kernel(%arg0: i32, %arg1: memref<8x16xf32, #tpu.memory_space<vmem>>, %arg2: memref<16x128xbf16, #tpu.memory_space<vmem>>, %arg3: memref<1x128xf32, #tpu.memory_space<vmem>>, %arg4: memref<128x128xbf16, #tpu.memory_space<vmem>>, %arg5: memref<1x128xf32, #tpu.memory_space<vmem>>, %arg6: memref<128x4xbf16, #tpu.memory_space<vmem>>, %arg7: memref<1x4xf32, #tpu.memory_space<vmem>>, %arg8: memref<8x4xf32, #tpu.memory_space<vmem>>) attributes {dimension_semantics = [#tpu.dimension_semantics<parallel>], iteration_bounds = array<i64: 1>, scalar_prefetch = 0 : i64, scratch_operands = 0 : i64, tpu.core_type = #tpu.core_type<tc>, window_params = [{transform_indices = @transform_0, window_bounds = array<i64: 8, 16>}, {pipeline_mode = #tpu.pipeline_mode<synchronous>, transform_indices = @transform_1, window_bounds = array<i64: 16, 128>}, {pipeline_mode = #tpu.pipeline_mode<synchronous>, transform_indices = @transform_2, window_bounds = array<i64: 1, 128>}, {pipeline_mode = #tpu.pipeline_mode<synchronous>, transform_indices = @transform_3, window_bounds = array<i64: 128, 128>}, {pipeline_mode = #tpu.pipeline_mode<synchronous>, transform_indices = @transform_4, window_bounds = array<i64: 1, 128>}, {pipeline_mode = #tpu.pipeline_mode<synchronous>, transform_indices = @transform_5, window_bounds = array<i64: 128, 4>}, {pipeline_mode = #tpu.pipeline_mode<synchronous>, transform_indices = @transform_6, window_bounds = array<i64: 1, 4>}, {transform_indices = @transform_7, window_bounds = array<i64: 8, 4>}]} {
    %c0 = arith.constant 0 : index
    %c0_0 = arith.constant 0 : index
    %0 = vector.load %arg1[%c0, %c0_0] : memref<8x16xf32, #tpu.memory_space<vmem>>, vector<8x16xf32>
    %c0_1 = arith.constant 0 : index
    %c0_2 = arith.constant 0 : index
    %1 = vector.load %arg2[%c0_1, %c0_2] : memref<16x128xbf16, #tpu.memory_space<vmem>>, vector<16x128xbf16>
    %2 = arith.extf %1 : vector<16x128xbf16> to vector<16x128xf32>
    %cst = arith.constant dense<0.000000e+00> : vector<8x128xf32>
    %3 = tpu.matmul %0, %2, %cst {dimension_numbers = #tpu.dot_dimension_numbers<[1], [0], [0], [1], [0, 0, 1, 1], [], []>} : vector<8x16xf32>, vector<16x128xf32>, vector<8x128xf32> -> vector<8x128xf32>
    %c0_3 = arith.constant 0 : index
    %c0_4 = arith.constant 0 : index
    %4 = vector.load %arg3[%c0_3, %c0_4] : memref<1x128xf32, #tpu.memory_space<vmem>>, vector<1x128xf32>
    %5 = vector.broadcast %4 : vector<1x128xf32> to vector<8x128xf32>
    %6 = arith.addf %3, %5 : vector<8x128xf32>
    %cst_5 = arith.constant 0.000000e+00 : f32
    %7 = vector.broadcast %cst_5 : f32 to vector<8x128xf32>
    %8 = arith.maximumf %6, %7 : vector<8x128xf32>
    %c0_6 = arith.constant 0 : index
    %c0_7 = arith.constant 0 : index
    %9 = vector.load %arg4[%c0_6, %c0_7] : memref<128x128xbf16, #tpu.memory_space<vmem>>, vector<128x128xbf16>
    %10 = arith.extf %9 : vector<128x128xbf16> to vector<128x128xf32>
    %cst_8 = arith.constant dense<0.000000e+00> : vector<8x128xf32>
    %11 = tpu.matmul %8, %10, %cst_8 {dimension_numbers = #tpu.dot_dimension_numbers<[1], [0], [0], [1], [0, 0, 1, 1], [], []>} : vector<8x128xf32>, vector<128x128xf32>, vector<8x128xf32> -> vector<8x128xf32>
    %c0_9 = arith.constant 0 : index
    %c0_10 = arith.constant 0 : index
    %12 = vector.load %arg5[%c0_9, %c0_10] : memref<1x128xf32, #tpu.memory_space<vmem>>, vector<1x128xf32>
    %13 = vector.broadcast %12 : vector<1x128xf32> to vector<8x128xf32>
    %14 = arith.addf %11, %13 : vector<8x128xf32>
    %cst_11 = arith.constant 0.000000e+00 : f32
    %15 = vector.broadcast %cst_11 : f32 to vector<8x128xf32>
    %16 = arith.maximumf %14, %15 : vector<8x128xf32>
    %c0_12 = arith.constant 0 : index
    %c0_13 = arith.constant 0 : index
    %17 = vector.load %arg6[%c0_12, %c0_13] : memref<128x4xbf16, #tpu.memory_space<vmem>>, vector<128x4xbf16>
    %18 = arith.extf %17 : vector<128x4xbf16> to vector<128x4xf32>
    %cst_14 = arith.constant dense<0.000000e+00> : vector<8x4xf32>
    %19 = tpu.matmul %16, %18, %cst_14 {dimension_numbers = #tpu.dot_dimension_numbers<[1], [0], [0], [1], [0, 0, 1, 1], [], []>} : vector<8x128xf32>, vector<128x4xf32>, vector<8x4xf32> -> vector<8x4xf32>
    %c0_15 = arith.constant 0 : index
    %c0_16 = arith.constant 0 : index
    %20 = vector.load %arg7[%c0_15, %c0_16] : memref<1x4xf32, #tpu.memory_space<vmem>>, vector<1x4xf32>
    %21 = vector.broadcast %20 : vector<1x4xf32> to vector<8x4xf32>
    %22 = arith.addf %19, %21 : vector<8x4xf32>
    %c0_17 = arith.constant 0 : index
    %c0_18 = arith.constant 0 : index
    %23 = vector.load %arg8[%c0_17, %c0_18] : memref<8x4xf32, #tpu.memory_space<vmem>>, vector<8x4xf32>
    tpu.vector_store %arg8[%c0_17, %c0_18], %22 {strides = array<i32>} : memref<8x4xf32, #tpu.memory_space<vmem>>, vector<8x4xf32>,
    return
  }
  func.func @transform_0(%arg0: i32) -> (i32, i32) {
    %c0_i32 = arith.constant 0 : i32
    %c0_i32_0 = arith.constant 0 : i32
    return %arg0, %c0_i32 : i32, i32
  }
  func.func @transform_1(%arg0: i32) -> (i32, i32) {
    %c0_i32 = arith.constant 0 : i32
    %c0_i32_0 = arith.constant 0 : i32
    %c0_i32_1 = arith.constant 0 : i32
    return %c0_i32, %c0_i32_0 : i32, i32
  }
  func.func @transform_2(%arg0: i32) -> (i32, i32) {
    %c0_i32 = arith.constant 0 : i32
    %c0_i32_0 = arith.constant 0 : i32
    %c0_i32_1 = arith.constant 0 : i32
    return %c0_i32, %c0_i32_0 : i32, i32
  }
  func.func @transform_3(%arg0: i32) -> (i32, i32) {
    %c0_i32 = arith.constant 0 : i32
    %c0_i32_0 = arith.constant 0 : i32
    %c0_i32_1 = arith.constant 0 : i32
    return %c0_i32, %c0_i32_0 : i32, i32
  }
  func.func @transform_4(%arg0: i32) -> (i32, i32) {
    %c0_i32 = arith.constant 0 : i32
    %c0_i32_0 = arith.constant 0 : i32
    %c0_i32_1 = arith.constant 0 : i32
    return %c0_i32, %c0_i32_0 : i32, i32
  }
  func.func @transform_5(%arg0: i32) -> (i32, i32) {
    %c0_i32 = arith.constant 0 : i32
    %c0_i32_0 = arith.constant 0 : i32
    %c0_i32_1 = arith.constant 0 : i32
    return %c0_i32, %c0_i32_0 : i32, i32
  }
  func.func @transform_6(%arg0: i32) -> (i32, i32) {
    %c0_i32 = arith.constant 0 : i32
    %c0_i32_0 = arith.constant 0 : i32
    %c0_i32_1 = arith.constant 0 : i32
    return %c0_i32, %c0_i32_0 : i32, i32
  }
  func.func @transform_7(%arg0: i32) -> (i32, i32) {
    %c0_i32 = arith.constant 0 : i32
    %c0_i32_0 = arith.constant 0 : i32
    return %arg0, %c0_i32 : i32, i32
  }
}

module attributes {stable_mosaic.version = 11 : i64} {
  func.func @_fcnn_kernel(%arg0: i32, %arg1: memref<8x16xf32, #tpu.memory_space<vmem>>, %arg2: memref<16x128xbf16, #tpu.memory_space<vmem>>, %arg3: memref<1x128xf32, #tpu.memory_space<vmem>>, %arg4: memref<128x128xbf16, #tpu.memory_space<vmem>>, %arg5: memref<1x128xf32, #tpu.memory_space<vmem>>, %arg6: memref<128x4xbf16, #tpu.memory_space<vmem>>, %arg7: memref<1x4xf32, #tpu.memory_space<vmem>>, %arg8: memref<8x4xf32, #tpu.memory_space<vmem>>) attributes {dimension_semantics = [#tpu.dimension_semantics<parallel>], iteration_bounds = array<i64: 1>, scalar_prefetch = 0 : i64, scratch_operands = 0 : i64, tpu.core_type = #tpu.core_type<tc>, window_params = [{transform_indices = @transform_0, window_bounds = array<i64: 8, 16>}, {pipeline_mode = #tpu.pipeline_mode<synchronous>, transform_indices = @transform_1, window_bounds = array<i64: 16, 128>}, {pipeline_mode = #tpu.pipeline_mode<synchronous>, transform_indices = @transform_2, window_bounds = array<i64: 1, 128>}, {pipeline_mode = #tpu.pipeline_mode<synchronous>, transform_indices = @transform_3, window_bounds = array<i64: 128, 128>}, {pipeline_mode = #tpu.pipeline_mode<synchronous>, transform_indices = @transform_4, window_bounds = array<i64: 1, 128>}, {pipeline_mode = #tpu.pipeline_mode<synchronous>, transform_indices = @transform_5, window_bounds = array<i64: 128, 4>}, {pipeline_mode = #tpu.pipeline_mode<synchronous>, transform_indices = @transform_6, window_bounds = array<i64: 1, 4>}, {transform_indices = @transform_7, window_bounds = array<i64: 8, 4>}]} {
    %c0 = arith.constant 0 : index
    %c0_0 = arith.constant 0 : index
    %0 = vector.load %arg1[%c0, %c0_0] : memref<8x16xf32, #tpu.memory_space<vmem>>, vector<8x16xf32>
    %c0_1 = arith.constant 0 : index
    %c0_2 = arith.constant 0 : index
    %1 = vector.load %arg2[%c0_1, %c0_2] : memref<16x128xbf16, #tpu.memory_space<vmem>>, vector<16x128xbf16>
    %2 = arith.extf %1 : vector<16x128xbf16> to vector<16x128xf32>
    %cst = arith.constant dense<0.000000e+00> : vector<8x128xf32>
    %3 = tpu.matmul %0, %2, %cst {dimension_numbers = #tpu.dot_dimension_numbers<[1], [0], [0], [1], [0, 0, 1, 1], [], []>} : vector<8x16xf32>, vector<16x128xf32>, vector<8x128xf32> -> vector<8x128xf32>
    %c0_3 = arith.constant 0 : index
    %c0_4 = arith.constant 0 : index
    %4 = vector.load %arg3[%c0_3, %c0_4] : memref<1x128xf32, #tpu.memory_space<vmem>>, vector<1x128xf32>
    %5 = vector.broadcast %4 : vector<1x128xf32> to vector<8x128xf32>
    %6 = arith.addf %3, %5 : vector<8x128xf32>
    %cst_5 = arith.constant 0.000000e+00 : f32
    %7 = vector.broadcast %cst_5 : f32 to vector<8x128xf32>
    %8 = arith.maximumf %6, %7 : vector<8x128xf32>
    %c0_6 = arith.constant 0 : index
    %c0_7 = arith.constant 0 : index
    %9 = vector.load %arg4[%c0_6, %c0_7] : memref<128x128xbf16, #tpu.memory_space<vmem>>, vector<128x128xbf16>
    %10 = arith.extf %9 : vector<128x128xbf16> to vector<128x128xf32>
    %cst_8 = arith.constant dense<0.000000e+00> : vector<8x128xf32>
    %11 = tpu.matmul %8, %10, %cst_8 {dimension_numbers = #tpu.dot_dimension_numbers<[1], [0], [0], [1], [0, 0, 1, 1], [], []>} : vector<8x128xf32>, vector<128x128xf32>, vector<8x128xf32> -> vector<8x128xf32>
    %c0_9 = arith.constant 0 : index
    %c0_10 = arith.constant 0 : index
    %12 = vector.load %arg5[%c0_9, %c0_10] : memref<1x128xf32, #tpu.memory_space<vmem>>, vector<1x128xf32>
    %13 = vector.broadcast %12 : vector<1x128xf32> to vector<8x128xf32>
    %14 = arith.addf %11, %13 : vector<8x128xf32>
    %cst_11 = arith.constant 0.000000e+00 : f32
    %15 = vector.broadcast %cst_11 : f32 to vector<8x128xf32>
    %16 = arith.maximumf %14, %15 : vector<8x128xf32>
    %c0_12 = arith.constant 0 : index
    %c0_13 = arith.constant 0 : index
    %17 = vector.load %arg6[%c0_12, %c0_13] : memref<128x4xbf16, #tpu.memory_space<vmem>>, vector<128x4xbf16>
    %18 = arith.extf %17 : vector<128x4xbf16> to vector<128x4xf32>
    %cst_14 = arith.constant dense<0.000000e+00> : vector<8x4xf32>
    %19 = tpu.matmul %16, %18, %cst_14 {dimension_numbers = #tpu.dot_dimension_numbers<[1], [0], [0], [1], [0, 0, 1, 1], [], []>} : vector<8x128xf32>, vector<128x4xf32>, vector<8x4xf32> -> vector<8x4xf32>
    %c0_15 = arith.constant 0 : index
    %c0_16 = arith.constant 0 : index
    %20 = vector.load %arg7[%c0_15, %c0_16] : memref<1x4xf32, #tpu.memory_space<vmem>>, vector<1x4xf32>
    %21 = vector.broadcast %20 : vector<1x4xf32> to vector<8x4xf32>
    %22 = arith.addf %19, %21 : vector<8x4xf32>
    %c0_17 = arith.constant 0 : index
    %c0_18 = arith.constant 0 : index
    %23 = vector.load %arg8[%c0_17, %c0_18] : memref<8x4xf32, #tpu.memory_space<vmem>>, vector<8x4xf32>
    tpu.vector_store %arg8[%c0_17, %c0_18], %22 {strides = array<i32>} : memref<8x4xf32, #tpu.memory_space<vmem>>, vector<8x4xf32>,
    return
  }
  func.func @transform_0(%arg0: i32) -> (i32, i32) {
    %c0_i32 = arith.constant 0 : i32
    %c0_i32_0 = arith.constant 0 : i32
    return %arg0, %c0_i32 : i32, i32
  }
  func.func @transform_1(%arg0: i32) -> (i32, i32) {
    %c0_i32 = arith.constant 0 : i32
    %c0_i32_0 = arith.constant 0 : i32
    %c0_i32_1 = arith.constant 0 : i32
    return %c0_i32, %c0_i32_0 : i32, i32
  }
  func.func @transform_2(%arg0: i32) -> (i32, i32) {
    %c0_i32 = arith.constant 0 : i32
    %c0_i32_0 = arith.constant 0 : i32
    %c0_i32_1 = arith.constant 0 : i32
    return %c0_i32, %c0_i32_0 : i32, i32
  }
  func.func @transform_3(%arg0: i32) -> (i32, i32) {
    %c0_i32 = arith.constant 0 : i32
    %c0_i32_0 = arith.constant 0 : i32
    %c0_i32_1 = arith.constant 0 : i32
    return %c0_i32, %c0_i32_0 : i32, i32
  }
  func.func @transform_4(%arg0: i32) -> (i32, i32) {
    %c0_i32 = arith.constant 0 : i32
    %c0_i32_0 = arith.constant 0 : i32
    %c0_i32_1 = arith.constant 0 : i32
    return %c0_i32, %c0_i32_0 : i32, i32
  }
  func.func @transform_5(%arg0: i32) -> (i32, i32) {
    %c0_i32 = arith.constant 0 : i32
    %c0_i32_0 = arith.constant 0 : i32
    %c0_i32_1 = arith.constant 0 : i32
    return %c0_i32, %c0_i32_0 : i32, i32
  }
  func.func @transform_6(%arg0: i32) -> (i32, i32) {
    %c0_i32 = arith.constant 0 : i32
    %c0_i32_0 = arith.constant 0 : i32
    %c0_i32_1 = arith.constant 0 : i32
    return %c0_i32, %c0_i32_0 : i32, i32
  }
  func.func @transform_7(%arg0: i32) -> (i32, i32) {
    %c0_i32 = arith.constant 0 : i32
    %c0_i32_0 = arith.constant 0 : i32
    return %arg0, %c0_i32 : i32, i32
  }
}

</mosaic_0001>

<llo_original>
// kernel: tpu_custom_call.1
$region0: #{tpu_custom_call.1}
  #allocation0 [shape = 'u32[]', space=smem, size = 0x4, offset = 0x4, fixed_abs, tag = 'smem constant byte address 0x4 - core index']
  #allocation1 [shape = 'u32[144,128]{1,0:T(1,128)}', space=vmem, size = 0x12000, scoped, tag = 'internal scratch']
  %s0 = inlined_call_operand.vmem [shape: f32[8,16], index: 0, kind: input, shape index: {}]
  %s1 = inlined_call_operand.hbm [shape: bf16[16,128], index: 1, kind: input, shape index: {}]
  %s2 = inlined_call_operand.vmem [shape: f32[1,128], index: 2, kind: input, shape index: {}]
  %s3 = inlined_call_operand.vmem [shape: bf16[128,128], index: 3, kind: input, shape index: {}]
  %s4 = inlined_call_operand.vmem [shape: f32[1,128], index: 4, kind: input, shape index: {}]
  %s5 = inlined_call_operand.vmem [shape: bf16[128,4], index: 5, kind: input, shape index: {}]
  %s6 = inlined_call_operand.vmem [shape: f32[1,4], index: 6, kind: input, shape index: {}]
  %s7 = inlined_call_operand.vmem [shape: f32[8,4], index: 7, kind: output, shape index: {}]
  %s8 = sld [smem:[#allocation0]]
  $region42: #{tpu_custom_call.1} parent=0
    _
  %s10 = ssub.s32 1, %s8
  %s11 = scalar_select 0, %s10, %s8
  $region1: #{tpu_custom_call.1} parent=0
    #allocation2 [shape = 'u8[4096]{0}', space=vmem, size = 0x1000, scoped, tag = 'input window, operand 1, single buffered']
    #allocation3 [shape = 's32[1]{0}', space=sflag, size = 0x4, scoped, tag = 'scoped memory for tpu_custom_call.1']
    %12 = vsyncpa [#allocation3], 0
    // Predicated region
    $region2: #{tpu_custom_call.1} parent=1 // pred_check
      _
    $region3: #{tpu_custom_call.1} parent=1 // pred_check_branch
      %14 = sbr.rel (0) target = $region5
    $region4: #{tpu_custom_call.1} parent=1 // pred_region
      _
    $region5: #{tpu_custom_call.1} parent=1 // pred_fallthru
      _
    // Predicated region
    $region6: #{tpu_custom_call.1} parent=1 // pred_check
      _
    $region7: #{tpu_custom_call.1} parent=1 // pred_check_branch
      %16 = sbr.rel (0) target = $region9
    $region8: #{tpu_custom_call.1} parent=1 // pred_region
      %s18 = ssub.s32 128, 128
      %19 = vsyncadd [#allocation3], %s18
      %s20 = sshll.u32 [#allocation2], 4
      %s21 = int_to_ptr.vmem [resolvable:$true] %s20
      %26 = dma.hbm_to_vmem [thread:$0]  %s1, 128, %s21, [#allocation3], 64, 64, 4
    $region9: #{tpu_custom_call.1} parent=1 // pred_fallthru
      _
    // Predicated region
    $region10: #{tpu_custom_call.1} parent=1 // pred_check
      _
    $region11: #{tpu_custom_call.1} parent=1 // pred_check_branch
      %28 = sbr.rel (0) target = $region13
    $region12: #{tpu_custom_call.1} parent=1 // pred_region
      _
    $region13: #{tpu_custom_call.1} parent=1 // pred_fallthru
      _
    // Predicated region
    $region14: #{tpu_custom_call.1} parent=1 // pred_check
      _
    $region15: #{tpu_custom_call.1} parent=1 // pred_check_branch
      %30 = sbr.rel (0) target = $region17
    $region16: #{tpu_custom_call.1} parent=1 // pred_region
      _
    $region17: #{tpu_custom_call.1} parent=1 // pred_fallthru
      _
    // Predicated region
    $region18: #{tpu_custom_call.1} parent=1 // pred_check
      _
    $region19: #{tpu_custom_call.1} parent=1 // pred_check_branch
      %32 = sbr.rel (0) target = $region21
    $region20: #{tpu_custom_call.1} parent=1 // pred_region
      _
    $region21: #{tpu_custom_call.1} parent=1 // pred_fallthru
      _
    // Predicated region
    $region22: #{tpu_custom_call.1} parent=1 // pred_check
      _
    $region23: #{tpu_custom_call.1} parent=1 // pred_check_branch
      %34 = sbr.rel (0) target = $region25
    $region24: #{tpu_custom_call.1} parent=1 // pred_region
      _
    $region25: #{tpu_custom_call.1} parent=1 // pred_fallthru
      _
    // Predicated region
    $region26: #{tpu_custom_call.1} parent=1 // pred_check
      _
    $region27: #{tpu_custom_call.1} parent=1 // pred_check_branch
      %36 = sbr.rel (0) target = $region29
    $region28: #{tpu_custom_call.1} parent=1 // pred_region
      _
    $region29: #{tpu_custom_call.1} parent=1 // pred_fallthru
      _
    // Predicated region
    $region30: #{tpu_custom_call.1} parent=1 // pred_check
      _
    $region31: #{tpu_custom_call.1} parent=1 // pred_check_branch
      %38 = sbr.rel (0) target = $region33
    $region32: #{tpu_custom_call.1} parent=1 // pred_region
      %39 = dma.done [#allocation3], 128
    $region33: #{tpu_custom_call.1} parent=1 // pred_fallthru
      _
    %v40 = vld [vmem:[%s0] sm:$0xff]
    %v41 = vld [vmem:[#allocation2] sm:$0xf]
    %v42 = vld [vmem:[#allocation2 + $0x4] sm:$0xf]
    %v43 = vunpack.c.l.bf16 %v41
    %v44 = vunpack.c.l.bf16 %v42
    %v45 = vld [vmem:[%s2] sm:$0x1]
    %v47 = vlaneseq
    %v48 = vshrl.u32 %v47, 7
    %v49 = vsub.s32 0, %v48
    %v50 = vrot.slane %v45, %v49
    %vm52 = vcmask 130048
    %v54 = vsel %vm52, %v40, 0
    %56 = vmatprep.subr.mxu0 0.0
    %57 = vmatpush1.msra.mxu0 %v43
    %58 = vmatprep.subr.mxu0 0.0
    %59 = vmatpush1.msra.mxu0 %v44
    %60 = vmatprep.subr.mxu0 0.0
    %61 = vmatpush1.msra.mxu0 0.0
    %62 = vmatprep.subr.mxu0 0.0
    %63 = vmatpush1.msra.mxu0 0.0
    %64 = vmatprep.subr.mxu0 0.0
    %65 = vmatpush1.msra.mxu0 0.0
    %66 = vmatprep.subr.mxu0 0.0
    %67 = vmatpush1.msra.mxu0 0.0
    %68 = vmatprep.subr.mxu0 0.0
    %69 = vmatpush1.msra.mxu0 0.0
    %70 = vmatprep.subr.mxu0 0.0
    %71 = vmatpush1.msra.mxu0 0.0
    %72 = vmatprep.subr.mxu0 0.0
    %73 = vmatpush1.msra.mxu0 0.0
    %74 = vmatprep.subr.mxu0 0.0
    %75 = vmatpush1.msra.mxu0 0.0
    %76 = vmatprep.subr.mxu0 0.0
    %77 = vmatpush1.msra.mxu0 0.0
    %78 = vmatprep.subr.mxu0 0.0
    %79 = vmatpush1.msra.mxu0 0.0
    %80 = vmatprep.subr.mxu0 0.0
    %81 = vmatpush1.msra.mxu0 0.0
    %82 = vmatprep.subr.mxu0 0.0
    %83 = vmatpush1.msra.mxu0 0.0
    %84 = vmatprep.subr.mxu0 0.0
    %85 = vmatpush1.msra.mxu0 0.0
    %86 = vmatprep.subr.mxu0 0.0
    %87 = vmatpush1.msra.mxu0 0.0
    %88 = vmatprep.subr.mxu0 0.0
    %89 = vmatpush1.msra.mxu0 0.0
    %90 = vmatprep.subr.mxu0 0.0
    %91 = vmatpush1.msra.mxu0 0.0
    %92 = vmatprep.subr.mxu0 0.0
    %93 = vmatpush1.msra.mxu0 0.0
    %94 = vmatprep.subr.mxu0 0.0
    %95 = vmatpush1.msra.mxu0 0.0
    %96 = vmatprep.subr.mxu0 0.0
    %97 = vmatpush1.msra.mxu0 0.0
    %98 = vmatprep.subr.mxu0 0.0
    %99 = vmatpush1.msra.mxu0 0.0
    %100 = vmatprep.subr.mxu0 0.0
    %101 = vmatpush1.msra.mxu0 0.0
    %102 = vmatprep.subr.mxu0 0.0
    %103 = vmatpush1.msra.mxu0 0.0
    %104 = vmatprep.subr.mxu0 0.0
    %105 = vmatpush1.msra.mxu0 0.0
    %106 = vmatprep.subr.mxu0 0.0
    %107 = vmatpush1.msra.mxu0 0.0
    %108 = vmatprep.subr.mxu0 0.0
    %109 = vmatpush1.msra.mxu0 0.0
    %110 = vmatprep.subr.mxu0 0.0
    %111 = vmatpush1.msra.mxu0 0.0
    %112 = vmatprep.subr.mxu0 0.0
    %113 = vmatpush1.msra.mxu0 0.0
    %114 = vmatprep.subr.mxu0 0.0
    %115 = vmatpush1.msra.mxu0 0.0
    %116 = vmatprep.subr.mxu0 0.0
    %117 = vmatpush1.msra.mxu0 0.0
    %118 = vmatprep.subr.mxu0 0.0
    %119 = vmatpush1.msra.mxu0 0.0
    %120 = vmatprep.mubr.f32.mxu0 0.0
    %121 = vmatmul.mubr.f32.gmra.mrb[0].mxu0 %v54
    %v122 = vpop.f32.mrb[0].mxu0
    %v123 = vadd.f32 %v50, %v122
    %v124 = vpop.f32.mrb[0].mxu0
    %125 = vdwg.mxu0
    %v126 = vmax.f32 %v123, 0.0
    %v127 = vld [vmem:[%s3] sm:$0xf]
    %v128 = vld [vmem:[%s3 + $0x4] sm:$0xf]
    %v129 = vld [vmem:[%s3 + $0x8] sm:$0xf]
    %v130 = vld [vmem:[%s3 + $0xc] sm:$0xf]
    %v131 = vld [vmem:[%s3 + $0x10] sm:$0xf]
    %v132 = vld [vmem:[%s3 + $0x14] sm:$0xf]
    %v133 = vld [vmem:[%s3 + $0x18] sm:$0xf]
    %v134 = vld [vmem:[%s3 + $0x1c] sm:$0xf]
    %v135 = vld [vmem:[%s3 + $0x20] sm:$0xf]
    %v136 = vld [vmem:[%s3 + $0x24] sm:$0xf]
    %v137 = vld [vmem:[%s3 + $0x28] sm:$0xf]
    %v138 = vld [vmem:[%s3 + $0x2c] sm:$0xf]
    %v139 = vld [vmem:[%s3 + $0x30] sm:$0xf]
    %v140 = vld [vmem:[%s3 + $0x34] sm:$0xf]
    %v141 = vld [vmem:[%s3 + $0x38] sm:$0xf]
    %v142 = vld [vmem:[%s3 + $0x3c] sm:$0xf]
    %v143 = vunpack.c.l.bf16 %v127
    %v144 = vunpack.c.l.bf16 %v128
    %v145 = vunpack.c.l.bf16 %v129
    %v146 = vunpack.c.l.bf16 %v130
    %v147 = vunpack.c.l.bf16 %v131
    %v148 = vunpack.c.l.bf16 %v132
    %v149 = vunpack.c.l.bf16 %v133
    %v150 = vunpack.c.l.bf16 %v134
    %v151 = vunpack.c.l.bf16 %v135
    %v152 = vunpack.c.l.bf16 %v136
    %v153 = vunpack.c.l.bf16 %v137
    %v154 = vunpack.c.l.bf16 %v138
    %v155 = vunpack.c.l.bf16 %v139
    %v156 = vunpack.c.l.bf16 %v140
    %v157 = vunpack.c.l.bf16 %v141
    %v158 = vunpack.c.l.bf16 %v142
    %v159 = vld [vmem:[%s4] sm:$0x1]
    %v161 = vlaneseq
    %v162 = vshrl.u32 %v161, 7
    %v163 = vsub.s32 0, %v162
    %v164 = vrot.slane %v159, %v163
    %166 = vmatprep.subr.mxu0 0.0
    %167 = vmatpush1.msra.mxu0 %v143
    %168 = vmatprep.subr.mxu0 0.0
    %169 = vmatpush1.msra.mxu0 %v144
    %170 = vmatprep.subr.mxu0 0.0
    %171 = vmatpush1.msra.mxu0 %v145
    %172 = vmatprep.subr.mxu0 0.0
    %173 = vmatpush1.msra.mxu0 %v146
    %174 = vmatprep.subr.mxu0 0.0
    %175 = vmatpush1.msra.mxu0 %v147
    %176 = vmatprep.subr.mxu0 0.0
    %177 = vmatpush1.msra.mxu0 %v148
    %178 = vmatprep.subr.mxu0 0.0
    %179 = vmatpush1.msra.mxu0 %v149
    %180 = vmatprep.subr.mxu0 0.0
    %181 = vmatpush1.msra.mxu0 %v150
    %182 = vmatprep.subr.mxu0 0.0
    %183 = vmatpush1.msra.mxu0 %v151
    %184 = vmatprep.subr.mxu0 0.0
    %185 = vmatpush1.msra.mxu0 %v152
    %186 = vmatprep.subr.mxu0 0.0
    %187 = vmatpush1.msra.mxu0 %v153
    %188 = vmatprep.subr.mxu0 0.0
    %189 = vmatpush1.msra.mxu0 %v154
    %190 = vmatprep.subr.mxu0 0.0
    %191 = vmatpush1.msra.mxu0 %v155
    %192 = vmatprep.subr.mxu0 0.0
    %193 = vmatpush1.msra.mxu0 %v156
    %194 = vmatprep.subr.mxu0 0.0
    %195 = vmatpush1.msra.mxu0 %v157
    %196 = vmatprep.subr.mxu0 0.0
    %197 = vmatpush1.msra.mxu0 %v158
    %198 = vmatprep.subr.mxu0 0.0
    %199 = vmatpush1.msra.mxu0 0.0
    %200 = vmatprep.subr.mxu0 0.0
    %201 = vmatpush1.msra.mxu0 0.0
    %202 = vmatprep.subr.mxu0 0.0
    %203 = vmatpush1.msra.mxu0 0.0
    %204 = vmatprep.subr.mxu0 0.0
    %205 = vmatpush1.msra.mxu0 0.0
    %206 = vmatprep.subr.mxu0 0.0
    %207 = vmatpush1.msra.mxu0 0.0
    %208 = vmatprep.subr.mxu0 0.0
    %209 = vmatpush1.msra.mxu0 0.0
    %210 = vmatprep.subr.mxu0 0.0
    %211 = vmatpush1.msra.mxu0 0.0
    %212 = vmatprep.subr.mxu0 0.0
    %213 = vmatpush1.msra.mxu0 0.0
    %214 = vmatprep.subr.mxu0 0.0
    %215 = vmatpush1.msra.mxu0 0.0
    %216 = vmatprep.subr.mxu0 0.0
    %217 = vmatpush1.msra.mxu0 0.0
    %218 = vmatprep.subr.mxu0 0.0
    %219 = vmatpush1.msra.mxu0 0.0
    %220 = vmatprep.subr.mxu0 0.0
    %221 = vmatpush1.msra.mxu0 0.0
    %222 = vmatprep.subr.mxu0 0.0
    %223 = vmatpush1.msra.mxu0 0.0
    %224 = vmatprep.subr.mxu0 0.0
    %225 = vmatpush1.msra.mxu0 0.0
    %226 = vmatprep.subr.mxu0 0.0
    %227 = vmatpush1.msra.mxu0 0.0
    %228 = vmatprep.subr.mxu0 0.0
    %229 = vmatpush1.msra.mxu0 0.0
    %230 = vmatprep.mubr.f32.mxu0 0.0
    %231 = vmatmul.mubr.f32.gmra.mrb[0].mxu0 %v126
    %v232 = vpop.f32.mrb[0].mxu0
    %v233 = vadd.f32 %v164, %v232
    %v234 = vpop.f32.mrb[0].mxu0
    %235 = vdwg.mxu0
    %v236 = vmax.f32 %v233, 0.0
    %v237 = vld [vmem:[%s5] sm:$0xf]
    %v238 = vld [vmem:[%s5 + $0x4] sm:$0xf]
    %v239 = vld [vmem:[%s5 + $0x8] sm:$0xf]
    %v240 = vld [vmem:[%s5 + $0xc] sm:$0xf]
    %v241 = vld [vmem:[%s5 + $0x10] sm:$0xf]
    %v242 = vld [vmem:[%s5 + $0x14] sm:$0xf]
    %v243 = vld [vmem:[%s5 + $0x18] sm:$0xf]
    %v244 = vld [vmem:[%s5 + $0x1c] sm:$0xf]
    %v245 = vld [vmem:[%s5 + $0x20] sm:$0xf]
    %v246 = vld [vmem:[%s5 + $0x24] sm:$0xf]
    %v247 = vld [vmem:[%s5 + $0x28] sm:$0xf]
    %v248 = vld [vmem:[%s5 + $0x2c] sm:$0xf]
    %v249 = vld [vmem:[%s5 + $0x30] sm:$0xf]
    %v250 = vld [vmem:[%s5 + $0x34] sm:$0xf]
    %v251 = vld [vmem:[%s5 + $0x38] sm:$0xf]
    %v252 = vld [vmem:[%s5 + $0x3c] sm:$0xf]
    %v253 = vunpack.c.l.bf16 %v237
    %v254 = vunpack.c.l.bf16 %v238
    %v255 = vunpack.c.l.bf16 %v239
    %v256 = vunpack.c.l.bf16 %v240
    %v257 = vunpack.c.l.bf16 %v241
    %v258 = vunpack.c.l.bf16 %v242
    %v259 = vunpack.c.l.bf16 %v243
    %v260 = vunpack.c.l.bf16 %v244
    %v261 = vunpack.c.l.bf16 %v245
    %v262 = vunpack.c.l.bf16 %v246
    %v263 = vunpack.c.l.bf16 %v247
    %v264 = vunpack.c.l.bf16 %v248
    %v265 = vunpack.c.l.bf16 %v249
    %v266 = vunpack.c.l.bf16 %v250
    %v267 = vunpack.c.l.bf16 %v251
    %v268 = vunpack.c.l.bf16 %v252
    %v269 = vld [vmem:[%s6] sm:$0x1]
    %v271 = vlaneseq
    %v272 = vshrl.u32 %v271, 7
    %v273 = vsub.s32 0, %v272
    %v274 = vrot.slane %v269, %v273
    %276 = vmatprep.subr.mxu0 0.0
    %277 = vmatpush1.msra.mxu0 %v253
    %278 = vmatprep.subr.mxu0 0.0
    %279 = vmatpush1.msra.mxu0 %v254
    %280 = vmatprep.subr.mxu0 0.0
    %281 = vmatpush1.msra.mxu0 %v255
    %282 = vmatprep.subr.mxu0 0.0
    %283 = vmatpush1.msra.mxu0 %v256
    %284 = vmatprep.subr.mxu0 0.0
    %285 = vmatpush1.msra.mxu0 %v257
    %286 = vmatprep.subr.mxu0 0.0
    %287 = vmatpush1.msra.mxu0 %v258
    %288 = vmatprep.subr.mxu0 0.0
    %289 = vmatpush1.msra.mxu0 %v259
    %290 = vmatprep.subr.mxu0 0.0
    %291 = vmatpush1.msra.mxu0 %v260
    %292 = vmatprep.subr.mxu0 0.0
    %293 = vmatpush1.msra.mxu0 %v261
    %294 = vmatprep.subr.mxu0 0.0
    %295 = vmatpush1.msra.mxu0 %v262
    %296 = vmatprep.subr.mxu0 0.0
    %297 = vmatpush1.msra.mxu0 %v263
    %298 = vmatprep.subr.mxu0 0.0
    %299 = vmatpush1.msra.mxu0 %v264
    %300 = vmatprep.subr.mxu0 0.0
    %301 = vmatpush1.msra.mxu0 %v265
    %302 = vmatprep.subr.mxu0 0.0
    %303 = vmatpush1.msra.mxu0 %v266
    %304 = vmatprep.subr.mxu0 0.0
    %305 = vmatpush1.msra.mxu0 %v267
    %306 = vmatprep.subr.mxu0 0.0
    %307 = vmatpush1.msra.mxu0 %v268
    %308 = vmatprep.subr.mxu0 0.0
    %309 = vmatpush1.msra.mxu0 0.0
    %310 = vmatprep.subr.mxu0 0.0
    %311 = vmatpush1.msra.mxu0 0.0
    %312 = vmatprep.subr.mxu0 0.0
    %313 = vmatpush1.msra.mxu0 0.0
    %314 = vmatprep.subr.mxu0 0.0
    %315 = vmatpush1.msra.mxu0 0.0
    %316 = vmatprep.subr.mxu0 0.0
    %317 = vmatpush1.msra.mxu0 0.0
    %318 = vmatprep.subr.mxu0 0.0
    %319 = vmatpush1.msra.mxu0 0.0
    %320 = vmatprep.subr.mxu0 0.0
    %321 = vmatpush1.msra.mxu0 0.0
    %322 = vmatprep.subr.mxu0 0.0
    %323 = vmatpush1.msra.mxu0 0.0
    %324 = vmatprep.subr.mxu0 0.0
    %325 = vmatpush1.msra.mxu0 0.0
    %326 = vmatprep.subr.mxu0 0.0
    %327 = vmatpush1.msra.mxu0 0.0
    %328 = vmatprep.subr.mxu0 0.0
    %329 = vmatpush1.msra.mxu0 0.0
    %330 = vmatprep.subr.mxu0 0.0
    %331 = vmatpush1.msra.mxu0 0.0
    %332 = vmatprep.subr.mxu0 0.0
    %333 = vmatpush1.msra.mxu0 0.0
    %334 = vmatprep.subr.mxu0 0.0
    %335 = vmatpush1.msra.mxu0 0.0
    %336 = vmatprep.subr.mxu0 0.0
    %337 = vmatpush1.msra.mxu0 0.0
    %338 = vmatprep.subr.mxu0 0.0
    %339 = vmatpush1.msra.mxu0 0.0
    %340 = vmatprep.mubr.f32.mxu0 0.0
    %341 = vmatmul.mubr.f32.gmra.mrb[0].mxu0 %v236
    %v342 = vpop.f32.mrb[0].mxu0
    %v343 = vadd.f32 %v274, %v342
    %v344 = vpop.f32.mrb[0].mxu0
    %345 = vdwg.mxu0
    %vm346 = vcmask 31744
    %347 = vst.msk [vmem:[%s7] sm:$0xff] %vm346, %v343
    // Predicated region
    $region34: #{tpu_custom_call.1} parent=1 // pred_check
      _
    $region35: #{tpu_custom_call.1} parent=1 // pred_check_branch
      %349 = sbr.rel (0) target = $region37
    $region36: #{tpu_custom_call.1} parent=1 // pred_region
      _
    $region37: #{tpu_custom_call.1} parent=1 // pred_fallthru
      _
    // Predicated region
    $region38: #{tpu_custom_call.1} parent=1 // pred_check
      _
    $region39: #{tpu_custom_call.1} parent=1 // pred_check_branch
      %351 = sbr.rel (0) target = $region41
    $region40: #{tpu_custom_call.1} parent=1 // pred_region
      _
    $region41: #{tpu_custom_call.1} parent=1 // pred_fallthru
      _
    %352 = vsyncpa [#allocation3], 1

// kernel: tpu_custom_call.1
$region0: #{tpu_custom_call.1}
  #allocation0 [shape = 'u32[]', space=smem, size = 0x4, offset = 0x4, fixed_abs, tag = 'smem constant byte address 0x4 - core index']
  #allocation1 [shape = 'u32[144,128]{1,0:T(1,128)}', space=vmem, size = 0x12000, scoped, tag = 'internal scratch']
  %s0 = inlined_call_operand.vmem [shape: f32[8,16], index: 0, kind: input, shape index: {}]
  %s1 = inlined_call_operand.hbm [shape: bf16[16,128], index: 1, kind: input, shape index: {}]
  %s2 = inlined_call_operand.vmem [shape: f32[1,128], index: 2, kind: input, shape index: {}]
  %s3 = inlined_call_operand.vmem [shape: bf16[128,128], index: 3, kind: input, shape index: {}]
  %s4 = inlined_call_operand.vmem [shape: f32[1,128], index: 4, kind: input, shape index: {}]
  %s5 = inlined_call_operand.vmem [shape: bf16[128,4], index: 5, kind: input, shape index: {}]
  %s6 = inlined_call_operand.vmem [shape: f32[1,4], index: 6, kind: input, shape index: {}]
  %s7 = inlined_call_operand.vmem [shape: f32[8,4], index: 7, kind: output, shape index: {}]
  %s8 = sld [smem:[#allocation0]]
  $region42: #{tpu_custom_call.1} parent=0
    _
  %s10 = ssub.s32 1, %s8
  %s11 = scalar_select 0, %s10, %s8
  $region1: #{tpu_custom_call.1} parent=0
    #allocation2 [shape = 'u8[4096]{0}', space=vmem, size = 0x1000, scoped, tag = 'input window, operand 1, single buffered']
    #allocation3 [shape = 's32[1]{0}', space=sflag, size = 0x4, scoped, tag = 'scoped memory for tpu_custom_call.1']
    %12 = vsyncpa [#allocation3], 0
    // Predicated region
    $region2: #{tpu_custom_call.1} parent=1 // pred_check
      _
    $region3: #{tpu_custom_call.1} parent=1 // pred_check_branch
      %14 = sbr.rel (0) target = $region5
    $region4: #{tpu_custom_call.1} parent=1 // pred_region
      _
    $region5: #{tpu_custom_call.1} parent=1 // pred_fallthru
      _
    // Predicated region
    $region6: #{tpu_custom_call.1} parent=1 // pred_check
      _
    $region7: #{tpu_custom_call.1} parent=1 // pred_check_branch
      %16 = sbr.rel (0) target = $region9
    $region8: #{tpu_custom_call.1} parent=1 // pred_region
      %s18 = ssub.s32 128, 128
      %19 = vsyncadd [#allocation3], %s18
      %s20 = sshll.u32 [#allocation2], 4
      %s21 = int_to_ptr.vmem [resolvable:$true] %s20
      %26 = dma.hbm_to_vmem [thread:$0]  %s1, 128, %s21, [#allocation3], 64, 64, 4
    $region9: #{tpu_custom_call.1} parent=1 // pred_fallthru
      _
    // Predicated region
    $region10: #{tpu_custom_call.1} parent=1 // pred_check
      _
    $region11: #{tpu_custom_call.1} parent=1 // pred_check_branch
      %28 = sbr.rel (0) target = $region13
    $region12: #{tpu_custom_call.1} parent=1 // pred_region
      _
    $region13: #{tpu_custom_call.1} parent=1 // pred_fallthru
      _
    // Predicated region
    $region14: #{tpu_custom_call.1} parent=1 // pred_check
      _
    $region15: #{tpu_custom_call.1} parent=1 // pred_check_branch
      %30 = sbr.rel (0) target = $region17
    $region16: #{tpu_custom_call.1} parent=1 // pred_region
      _
    $region17: #{tpu_custom_call.1} parent=1 // pred_fallthru
      _
    // Predicated region
    $region18: #{tpu_custom_call.1} parent=1 // pred_check
      _
    $region19: #{tpu_custom_call.1} parent=1 // pred_check_branch
      %32 = sbr.rel (0) target = $region21
    $region20: #{tpu_custom_call.1} parent=1 // pred_region
      _
    $region21: #{tpu_custom_call.1} parent=1 // pred_fallthru
      _
    // Predicated region
    $region22: #{tpu_custom_call.1} parent=1 // pred_check
      _
    $region23: #{tpu_custom_call.1} parent=1 // pred_check_branch
      %34 = sbr.rel (0) target = $region25
    $region24: #{tpu_custom_call.1} parent=1 // pred_region
      _
    $region25: #{tpu_custom_call.1} parent=1 // pred_fallthru
      _
    // Predicated region
    $region26: #{tpu_custom_call.1} parent=1 // pred_check
      _
    $region27: #{tpu_custom_call.1} parent=1 // pred_check_branch
      %36 = sbr.rel (0) target = $region29
    $region28: #{tpu_custom_call.1} parent=1 // pred_region
      _
    $region29: #{tpu_custom_call.1} parent=1 // pred_fallthru
      _
    // Predicated region
    $region30: #{tpu_custom_call.1} parent=1 // pred_check
      _
    $region31: #{tpu_custom_call.1} parent=1 // pred_check_branch
      %38 = sbr.rel (0) target = $region33
    $region32: #{tpu_custom_call.1} parent=1 // pred_region
      %39 = dma.done [#allocation3], 128
    $region33: #{tpu_custom_call.1} parent=1 // pred_fallthru
      _
    %v40 = vld [vmem:[%s0] sm:$0xff]
    %v41 = vld [vmem:[#allocation2] sm:$0xf]
    %v42 = vld [vmem:[#allocation2 + $0x4] sm:$0xf]
    %v43 = vunpack.c.l.bf16 %v41
    %v44 = vunpack.c.l.bf16 %v42
    %v45 = vld [vmem:[%s2] sm:$0x1]
    %v47 = vlaneseq
    %v48 = vshrl.u32 %v47, 7
    %v49 = vsub.s32 0, %v48
    %v50 = vrot.slane %v45, %v49
    %vm52 = vcmask 130048
    %v54 = vsel %vm52, %v40, 0
    %56 = vmatprep.subr.mxu0 0.0
    %57 = vmatpush1.msra.mxu0 %v43
    %58 = vmatprep.subr.mxu0 0.0
    %59 = vmatpush1.msra.mxu0 %v44
    %60 = vmatprep.subr.mxu0 0.0
    %61 = vmatpush1.msra.mxu0 0.0
    %62 = vmatprep.subr.mxu0 0.0
    %63 = vmatpush1.msra.mxu0 0.0
    %64 = vmatprep.subr.mxu0 0.0
    %65 = vmatpush1.msra.mxu0 0.0
    %66 = vmatprep.subr.mxu0 0.0
    %67 = vmatpush1.msra.mxu0 0.0
    %68 = vmatprep.subr.mxu0 0.0
    %69 = vmatpush1.msra.mxu0 0.0
    %70 = vmatprep.subr.mxu0 0.0
    %71 = vmatpush1.msra.mxu0 0.0
    %72 = vmatprep.subr.mxu0 0.0
    %73 = vmatpush1.msra.mxu0 0.0
    %74 = vmatprep.subr.mxu0 0.0
    %75 = vmatpush1.msra.mxu0 0.0
    %76 = vmatprep.subr.mxu0 0.0
    %77 = vmatpush1.msra.mxu0 0.0
    %78 = vmatprep.subr.mxu0 0.0
    %79 = vmatpush1.msra.mxu0 0.0
    %80 = vmatprep.subr.mxu0 0.0
    %81 = vmatpush1.msra.mxu0 0.0
    %82 = vmatprep.subr.mxu0 0.0
    %83 = vmatpush1.msra.mxu0 0.0
    %84 = vmatprep.subr.mxu0 0.0
    %85 = vmatpush1.msra.mxu0 0.0
    %86 = vmatprep.subr.mxu0 0.0
    %87 = vmatpush1.msra.mxu0 0.0
    %88 = vmatprep.subr.mxu0 0.0
    %89 = vmatpush1.msra.mxu0 0.0
    %90 = vmatprep.subr.mxu0 0.0
    %91 = vmatpush1.msra.mxu0 0.0
    %92 = vmatprep.subr.mxu0 0.0
    %93 = vmatpush1.msra.mxu0 0.0
    %94 = vmatprep.subr.mxu0 0.0
    %95 = vmatpush1.msra.mxu0 0.0
    %96 = vmatprep.subr.mxu0 0.0
    %97 = vmatpush1.msra.mxu0 0.0
    %98 = vmatprep.subr.mxu0 0.0
    %99 = vmatpush1.msra.mxu0 0.0
    %100 = vmatprep.subr.mxu0 0.0
    %101 = vmatpush1.msra.mxu0 0.0
    %102 = vmatprep.subr.mxu0 0.0
    %103 = vmatpush1.msra.mxu0 0.0
    %104 = vmatprep.subr.mxu0 0.0
    %105 = vmatpush1.msra.mxu0 0.0
    %106 = vmatprep.subr.mxu0 0.0
    %107 = vmatpush1.msra.mxu0 0.0
    %108 = vmatprep.subr.mxu0 0.0
    %109 = vmatpush1.msra.mxu0 0.0
    %110 = vmatprep.subr.mxu0 0.0
    %111 = vmatpush1.msra.mxu0 0.0
    %112 = vmatprep.subr.mxu0 0.0
    %113 = vmatpush1.msra.mxu0 0.0
    %114 = vmatprep.subr.mxu0 0.0
    %115 = vmatpush1.msra.mxu0 0.0
    %116 = vmatprep.subr.mxu0 0.0
    %117 = vmatpush1.msra.mxu0 0.0
    %118 = vmatprep.subr.mxu0 0.0
    %119 = vmatpush1.msra.mxu0 0.0
    %120 = vmatprep.mubr.f32.mxu0 0.0
    %121 = vmatmul.mubr.f32.gmra.mrb[0].mxu0 %v54
    %v122 = vpop.f32.mrb[0].mxu0
    %v123 = vadd.f32 %v50, %v122
    %v124 = vpop.f32.mrb[0].mxu0
    %125 = vdwg.mxu0
    %v126 = vmax.f32 %v123, 0.0
    %v127 = vld [vmem:[%s3] sm:$0xf]
    %v128 = vld [vmem:[%s3 + $0x4] sm:$0xf]
    %v129 = vld [vmem:[%s3 + $0x8] sm:$0xf]
    %v130 = vld [vmem:[%s3 + $0xc] sm:$0xf]
    %v131 = vld [vmem:[%s3 + $0x10] sm:$0xf]
    %v132 = vld [vmem:[%s3 + $0x14] sm:$0xf]
    %v133 = vld [vmem:[%s3 + $0x18] sm:$0xf]
    %v134 = vld [vmem:[%s3 + $0x1c] sm:$0xf]
    %v135 = vld [vmem:[%s3 + $0x20] sm:$0xf]
    %v136 = vld [vmem:[%s3 + $0x24] sm:$0xf]
    %v137 = vld [vmem:[%s3 + $0x28] sm:$0xf]
    %v138 = vld [vmem:[%s3 + $0x2c] sm:$0xf]
    %v139 = vld [vmem:[%s3 + $0x30] sm:$0xf]
    %v140 = vld [vmem:[%s3 + $0x34] sm:$0xf]
    %v141 = vld [vmem:[%s3 + $0x38] sm:$0xf]
    %v142 = vld [vmem:[%s3 + $0x3c] sm:$0xf]
    %v143 = vunpack.c.l.bf16 %v127
    %v144 = vunpack.c.l.bf16 %v128
    %v145 = vunpack.c.l.bf16 %v129
    %v146 = vunpack.c.l.bf16 %v130
    %v147 = vunpack.c.l.bf16 %v131
    %v148 = vunpack.c.l.bf16 %v132
    %v149 = vunpack.c.l.bf16 %v133
    %v150 = vunpack.c.l.bf16 %v134
    %v151 = vunpack.c.l.bf16 %v135
    %v152 = vunpack.c.l.bf16 %v136
    %v153 = vunpack.c.l.bf16 %v137
    %v154 = vunpack.c.l.bf16 %v138
    %v155 = vunpack.c.l.bf16 %v139
    %v156 = vunpack.c.l.bf16 %v140
    %v157 = vunpack.c.l.bf16 %v141
    %v158 = vunpack.c.l.bf16 %v142
    %v159 = vld [vmem:[%s4] sm:$0x1]
    %v161 = vlaneseq
    %v162 = vshrl.u32 %v161, 7
    %v163 = vsub.s32 0, %v162
    %v164 = vrot.slane %v159, %v163
    %166 = vmatprep.subr.mxu0 0.0
    %167 = vmatpush1.msra.mxu0 %v143
    %168 = vmatprep.subr.mxu0 0.0
    %169 = vmatpush1.msra.mxu0 %v144
    %170 = vmatprep.subr.mxu0 0.0
    %171 = vmatpush1.msra.mxu0 %v145
    %172 = vmatprep.subr.mxu0 0.0
    %173 = vmatpush1.msra.mxu0 %v146
    %174 = vmatprep.subr.mxu0 0.0
    %175 = vmatpush1.msra.mxu0 %v147
    %176 = vmatprep.subr.mxu0 0.0
    %177 = vmatpush1.msra.mxu0 %v148
    %178 = vmatprep.subr.mxu0 0.0
    %179 = vmatpush1.msra.mxu0 %v149
    %180 = vmatprep.subr.mxu0 0.0
    %181 = vmatpush1.msra.mxu0 %v150
    %182 = vmatprep.subr.mxu0 0.0
    %183 = vmatpush1.msra.mxu0 %v151
    %184 = vmatprep.subr.mxu0 0.0
    %185 = vmatpush1.msra.mxu0 %v152
    %186 = vmatprep.subr.mxu0 0.0
    %187 = vmatpush1.msra.mxu0 %v153
    %188 = vmatprep.subr.mxu0 0.0
    %189 = vmatpush1.msra.mxu0 %v154
    %190 = vmatprep.subr.mxu0 0.0
    %191 = vmatpush1.msra.mxu0 %v155
    %192 = vmatprep.subr.mxu0 0.0
    %193 = vmatpush1.msra.mxu0 %v156
    %194 = vmatprep.subr.mxu0 0.0
    %195 = vmatpush1.msra.mxu0 %v157
    %196 = vmatprep.subr.mxu0 0.0
    %197 = vmatpush1.msra.mxu0 %v158
    %198 = vmatprep.subr.mxu0 0.0
    %199 = vmatpush1.msra.mxu0 0.0
    %200 = vmatprep.subr.mxu0 0.0
    %201 = vmatpush1.msra.mxu0 0.0
    %202 = vmatprep.subr.mxu0 0.0
    %203 = vmatpush1.msra.mxu0 0.0
    %204 = vmatprep.subr.mxu0 0.0
    %205 = vmatpush1.msra.mxu0 0.0
    %206 = vmatprep.subr.mxu0 0.0
    %207 = vmatpush1.msra.mxu0 0.0
    %208 = vmatprep.subr.mxu0 0.0
    %209 = vmatpush1.msra.mxu0 0.0
    %210 = vmatprep.subr.mxu0 0.0
    %211 = vmatpush1.msra.mxu0 0.0
    %212 = vmatprep.subr.mxu0 0.0
    %213 = vmatpush1.msra.mxu0 0.0
    %214 = vmatprep.subr.mxu0 0.0
    %215 = vmatpush1.msra.mxu0 0.0
    %216 = vmatprep.subr.mxu0 0.0
    %217 = vmatpush1.msra.mxu0 0.0
    %218 = vmatprep.subr.mxu0 0.0
    %219 = vmatpush1.msra.mxu0 0.0
    %220 = vmatprep.subr.mxu0 0.0
    %221 = vmatpush1.msra.mxu0 0.0
    %222 = vmatprep.subr.mxu0 0.0
    %223 = vmatpush1.msra.mxu0 0.0
    %224 = vmatprep.subr.mxu0 0.0
    %225 = vmatpush1.msra.mxu0 0.0
    %226 = vmatprep.subr.mxu0 0.0
    %227 = vmatpush1.msra.mxu0 0.0
    %228 = vmatprep.subr.mxu0 0.0
    %229 = vmatpush1.msra.mxu0 0.0
    %230 = vmatprep.mubr.f32.mxu0 0.0
    %231 = vmatmul.mubr.f32.gmra.mrb[0].mxu0 %v126
    %v232 = vpop.f32.mrb[0].mxu0
    %v233 = vadd.f32 %v164, %v232
    %v234 = vpop.f32.mrb[0].mxu0
    %235 = vdwg.mxu0
    %v236 = vmax.f32 %v233, 0.0
    %v237 = vld [vmem:[%s5] sm:$0xf]
    %v238 = vld [vmem:[%s5 + $0x4] sm:$0xf]
    %v239 = vld [vmem:[%s5 + $0x8] sm:$0xf]
    %v240 = vld [vmem:[%s5 + $0xc] sm:$0xf]
    %v241 = vld [vmem:[%s5 + $0x10] sm:$0xf]
    %v242 = vld [vmem:[%s5 + $0x14] sm:$0xf]
    %v243 = vld [vmem:[%s5 + $0x18] sm:$0xf]
    %v244 = vld [vmem:[%s5 + $0x1c] sm:$0xf]
    %v245 = vld [vmem:[%s5 + $0x20] sm:$0xf]
    %v246 = vld [vmem:[%s5 + $0x24] sm:$0xf]
    %v247 = vld [vmem:[%s5 + $0x28] sm:$0xf]
    %v248 = vld [vmem:[%s5 + $0x2c] sm:$0xf]
    %v249 = vld [vmem:[%s5 + $0x30] sm:$0xf]
    %v250 = vld [vmem:[%s5 + $0x34] sm:$0xf]
    %v251 = vld [vmem:[%s5 + $0x38] sm:$0xf]
    %v252 = vld [vmem:[%s5 + $0x3c] sm:$0xf]
    %v253 = vunpack.c.l.bf16 %v237
    %v254 = vunpack.c.l.bf16 %v238
    %v255 = vunpack.c.l.bf16 %v239
    %v256 = vunpack.c.l.bf16 %v240
    %v257 = vunpack.c.l.bf16 %v241
    %v258 = vunpack.c.l.bf16 %v242
    %v259 = vunpack.c.l.bf16 %v243
    %v260 = vunpack.c.l.bf16 %v244
    %v261 = vunpack.c.l.bf16 %v245
    %v262 = vunpack.c.l.bf16 %v246
    %v263 = vunpack.c.l.bf16 %v247
    %v264 = vunpack.c.l.bf16 %v248
    %v265 = vunpack.c.l.bf16 %v249
    %v266 = vunpack.c.l.bf16 %v250
    %v267 = vunpack.c.l.bf16 %v251
    %v268 = vunpack.c.l.bf16 %v252
    %v269 = vld [vmem:[%s6] sm:$0x1]
    %v271 = vlaneseq
    %v272 = vshrl.u32 %v271, 7
    %v273 = vsub.s32 0, %v272
    %v274 = vrot.slane %v269, %v273
    %276 = vmatprep.subr.mxu0 0.0
    %277 = vmatpush1.msra.mxu0 %v253
    %278 = vmatprep.subr.mxu0 0.0
    %279 = vmatpush1.msra.mxu0 %v254
    %280 = vmatprep.subr.mxu0 0.0
    %281 = vmatpush1.msra.mxu0 %v255
    %282 = vmatprep.subr.mxu0 0.0
    %283 = vmatpush1.msra.mxu0 %v256
    %284 = vmatprep.subr.mxu0 0.0
    %285 = vmatpush1.msra.mxu0 %v257
    %286 = vmatprep.subr.mxu0 0.0
    %287 = vmatpush1.msra.mxu0 %v258
    %288 = vmatprep.subr.mxu0 0.0
    %289 = vmatpush1.msra.mxu0 %v259
    %290 = vmatprep.subr.mxu0 0.0
    %291 = vmatpush1.msra.mxu0 %v260
    %292 = vmatprep.subr.mxu0 0.0
    %293 = vmatpush1.msra.mxu0 %v261
    %294 = vmatprep.subr.mxu0 0.0
    %295 = vmatpush1.msra.mxu0 %v262
    %296 = vmatprep.subr.mxu0 0.0
    %297 = vmatpush1.msra.mxu0 %v263
    %298 = vmatprep.subr.mxu0 0.0
    %299 = vmatpush1.msra.mxu0 %v264
    %300 = vmatprep.subr.mxu0 0.0
    %301 = vmatpush1.msra.mxu0 %v265
    %302 = vmatprep.subr.mxu0 0.0
    %303 = vmatpush1.msra.mxu0 %v266
    %304 = vmatprep.subr.mxu0 0.0
    %305 = vmatpush1.msra.mxu0 %v267
    %306 = vmatprep.subr.mxu0 0.0
    %307 = vmatpush1.msra.mxu0 %v268
    %308 = vmatprep.subr.mxu0 0.0
    %309 = vmatpush1.msra.mxu0 0.0
    %310 = vmatprep.subr.mxu0 0.0
    %311 = vmatpush1.msra.mxu0 0.0
    %312 = vmatprep.subr.mxu0 0.0
    %313 = vmatpush1.msra.mxu0 0.0
    %314 = vmatprep.subr.mxu0 0.0
    %315 = vmatpush1.msra.mxu0 0.0
    %316 = vmatprep.subr.mxu0 0.0
    %317 = vmatpush1.msra.mxu0 0.0
    %318 = vmatprep.subr.mxu0 0.0
    %319 = vmatpush1.msra.mxu0 0.0
    %320 = vmatprep.subr.mxu0 0.0
    %321 = vmatpush1.msra.mxu0 0.0
    %322 = vmatprep.subr.mxu0 0.0
    %323 = vmatpush1.msra.mxu0 0.0
    %324 = vmatprep.subr.mxu0 0.0
    %325 = vmatpush1.msra.mxu0 0.0
    %326 = vmatprep.subr.mxu0 0.0
    %327 = vmatpush1.msra.mxu0 0.0
    %328 = vmatprep.subr.mxu0 0.0
    %329 = vmatpush1.msra.mxu0 0.0
    %330 = vmatprep.subr.mxu0 0.0
    %331 = vmatpush1.msra.mxu0 0.0
    %332 = vmatprep.subr.mxu0 0.0
    %333 = vmatpush1.msra.mxu0 0.0
    %334 = vmatprep.subr.mxu0 0.0
    %335 = vmatpush1.msra.mxu0 0.0
    %336 = vmatprep.subr.mxu0 0.0
    %337 = vmatpush1.msra.mxu0 0.0
    %338 = vmatprep.subr.mxu0 0.0
    %339 = vmatpush1.msra.mxu0 0.0
    %340 = vmatprep.mubr.f32.mxu0 0.0
    %341 = vmatmul.mubr.f32.gmra.mrb[0].mxu0 %v236
    %v342 = vpop.f32.mrb[0].mxu0
    %v343 = vadd.f32 %v274, %v342
    %v344 = vpop.f32.mrb[0].mxu0
    %345 = vdwg.mxu0
    %vm346 = vcmask 31744
    %347 = vst.msk [vmem:[%s7] sm:$0xff] %vm346, %v343
    // Predicated region
    $region34: #{tpu_custom_call.1} parent=1 // pred_check
      _
    $region35: #{tpu_custom_call.1} parent=1 // pred_check_branch
      %349 = sbr.rel (0) target = $region37
    $region36: #{tpu_custom_call.1} parent=1 // pred_region
      _
    $region37: #{tpu_custom_call.1} parent=1 // pred_fallthru
      _
    // Predicated region
    $region38: #{tpu_custom_call.1} parent=1 // pred_check
      _
    $region39: #{tpu_custom_call.1} parent=1 // pred_check_branch
      %351 = sbr.rel (0) target = $region41
    $region40: #{tpu_custom_call.1} parent=1 // pred_region
      _
    $region41: #{tpu_custom_call.1} parent=1 // pred_fallthru
      _
    %352 = vsyncpa [#allocation3], 1

</llo_original>
